<compile_context>
chip_gen: v7x
topology: tpu7x:2x2x1
jax: 0.10.0
libtpu: 0.0.40
codegen_flags: <defaults>
</compile_context>

<pallas_src>
import jax
import jax.numpy as jnp
from jax.experimental import pallas as pl
from jax.experimental.pallas import tpu as pltpu


def _pad_mask_kernel(x_ref, o_ref):
    # Elementwise compare-to-zero + cast to float32 on the VPU.
    # Purely HBM-bandwidth-bound; no MXU/EUP/XLU work.
    o_ref[...] = (x_ref[...] == 0).astype(jnp.float32)


def _round_up(n, m):
    return ((n + m - 1) // m) * m


def _vmem_capacity_bytes():
    """Physical VMEM per TensorCore (128 MiB v5e/v6e, 64 MiB v7x)."""
    try:
        return int(pltpu.get_tpu_info().vmem_capacity_bytes)
    except Exception:
        return 64 * 1024 * 1024  # conservative default (v7x per-TC size)


def _choose_tiles(B, L, block_elems_budget):
    """Pick (TB, TL): TB a multiple of 8, TL a multiple of 128 (or TL == L)."""
    b_rounded = _round_up(B, 8)
    if 8 * L <= block_elems_budget:
        # Common case: keep the full, lane-dense L and grow the row tile.
        tb = max(8, min(((block_elems_budget // L) // 8) * 8, b_rounded))
        return tb, L
    # Very long L: even a single 8-row stripe of full L exceeds the budget
    # (would blow v7x's 64 MiB VMEM double-buffered).  Tile L in lane-dense
    # multiples of 128; partial edge blocks are clipped on writeback.
    tl = max(128, ((block_elems_budget // 8) // 128) * 128)
    tl = min(tl, _round_up(L, 128))
    return 8, tl


def attn_pad_mask(x):
    """x: int array [B, L] of token ids (pass int32). Returns float32 [B, 1, 1, L]."""
    B, L = x.shape

    vmem_cap = _vmem_capacity_bytes()
    # Double-buffered in(4 B) + out(4 B) => 16 B of VMEM per block element.
    # Keep the pipelined footprint <= half of physical VMEM (headroom for
    # compiler scratch): 128 MiB VMEM -> ~4M-elem blocks, 64 MiB -> ~2M.
    block_elems_budget = max(1024, vmem_cap // 32)
    TB, TL = _choose_tiles(B, L, block_elems_budget)

    footprint = 16 * TB * TL  # double-buffered in+out, bytes
    vmem_limit = min(vmem_cap * 3 // 4,
                     max(footprint + footprint // 2, 4 * 1024 * 1024))

    grid = (pl.cdiv(B, TB), pl.cdiv(L, TL))

    mask_2d = pl.pallas_call(
        _pad_mask_kernel,
        out_shape=jax.ShapeDtypeStruct((B, L), jnp.float32),
        grid=grid,
        in_specs=[pl.BlockSpec((TB, TL), lambda i, j: (i, j))],
        out_specs=pl.BlockSpec((TB, TL), lambda i, j: (i, j)),
        compiler_params=pltpu.CompilerParams(
            dimension_semantics=("parallel", "parallel"),
            vmem_limit_bytes=vmem_limit,
        ),
        cost_estimate=pl.CostEstimate(
            flops=B * L, transcendentals=0, bytes_accessed=8 * B * L),
    )(x)

    # unsqueeze(1).unsqueeze(2): [B, L] -> [B, 1, 1, L].  Adding size-1 dims is
    # a metadata-only bitcast in XLA; emitting (B, 1, 1, L) directly from the
    # kernel would force a (1, L)-minor VMEM tile (8x sublane padding + masked
    # stores), so the 2-D lane-dense output + reshape is the faster layout.
    return mask_2d.reshape(B, 1, 1, L)


if __name__ == "__main__":
    key = jax.random.PRNGKey(0)
    B, L = 2, 128
    # Deterministic token ids in [0, 4) so some entries are exactly 0 (padding).
    # NOTE: PyTorch token ids are typically int64; pass int32 on TPU.
    x = jax.random.randint(key, (B, L), minval=0, maxval=4, dtype=jnp.int32)

    mask = attn_pad_mask(x)
    jax.block_until_ready(mask)

    # Sanity check against the plain-JAX reference.
    ref = (x == 0).astype(jnp.float32).reshape(B, 1, 1, L)
    assert mask.shape == (B, 1, 1, L)
    assert mask.dtype == jnp.float32
    assert bool(jnp.all(mask == ref))

    print("KERNEL_OK")
</pallas_src>

<mosaic_0001>
module attributes {stable_mosaic.version = 11 : i64} {
  func.func @_pad_mask_kernel(%arg0: i32, %arg1: i32, %arg2: memref<8x128xi32, #tpu.memory_space<vmem>>, %arg3: memref<8x128xf32, #tpu.memory_space<vmem>>) attributes {dimension_semantics = [#tpu.dimension_semantics<parallel>, #tpu.dimension_semantics<parallel>], iteration_bounds = array<i64: 1, 1>, scalar_prefetch = 0 : i64, scratch_operands = 0 : i64, tpu.core_type = #tpu.core_type<tc>, window_params = [{transform_indices = @transform_0, window_bounds = array<i64: 8, 128>}, {transform_indices = @transform_1, window_bounds = array<i64: 8, 128>}]} {
    %c0 = arith.constant 0 : index
    %c0_0 = arith.constant 0 : index
    %0 = vector.load %arg2[%c0, %c0_0] : memref<8x128xi32, #tpu.memory_space<vmem>>, vector<8x128xi32>
    %c0_i32 = arith.constant 0 : i32
    %1 = vector.broadcast %c0_i32 : i32 to vector<8x128xi32>
    %2 = arith.cmpi eq, %0, %1 : vector<8x128xi32>
    %3 = arith.extui %2 : vector<8x128xi1> to vector<8x128xi32>
    %4 = arith.sitofp %3 : vector<8x128xi32> to vector<8x128xf32>
    %c0_1 = arith.constant 0 : index
    %c0_2 = arith.constant 0 : index
    %5 = vector.load %arg3[%c0_1, %c0_2] : memref<8x128xf32, #tpu.memory_space<vmem>>, vector<8x128xf32>
    tpu.vector_store %arg3[%c0_1, %c0_2], %4 {strides = array<i32>} : memref<8x128xf32, #tpu.memory_space<vmem>>, vector<8x128xf32>,
    return
  }
  func.func @transform_0(%arg0: i32, %arg1: i32) -> (i32, i32) {
    %c0_i32 = arith.constant 0 : i32
    return %arg0, %arg1 : i32, i32
  }
  func.func @transform_1(%arg0: i32, %arg1: i32) -> (i32, i32) {
    %c0_i32 = arith.constant 0 : i32
    return %arg0, %arg1 : i32, i32
  }
}

</mosaic_0001>

<llo_original>
// kernel: tpu_custom_call.1
$region0: #{tpu_custom_call.1}
  #allocation0 [shape = 'u32[]', space=smem, size = 0x4, offset = 0x4, fixed_abs, tag = 'smem constant byte address 0x4 - core index']
  #allocation1 [shape = 'u32[144,128]{1,0:T(1,128)}', space=vmem, size = 0x12000, scoped, tag = 'internal scratch']
  %s0 = inlined_call_operand.hbm [shape: s32[2,128], index: 0, kind: input, shape index: {}]
  %s1 = inlined_call_operand.hbm [shape: f32[2,128], index: 1, kind: output, shape index: {}]
  %s2 = sld [smem:[#allocation0]]
  $region18: #{tpu_custom_call.1} parent=0
    _
  %s4 = ssub.s32 1, %s2
  %s5 = scalar_select 0, %s4, %s2
  $region1: #{tpu_custom_call.1} parent=0
    #allocation2 [shape = 'u8[4096]{0}', space=vmem, size = 0x1000, scoped, tag = 'input window, operand 0, single buffered']
    #allocation3 [shape = 's32[1]{0}', space=sflag, size = 0x4, scoped, tag = 'scoped memory for tpu_custom_call.1']
    #allocation4 [shape = 's32[1]{0}', space=sflag, size = 0x4, scoped, tag = 'scoped memory for tpu_custom_call.1']
    #allocation5 [shape = 'u8[4096]{0}', space=vmem, size = 0x1000, scoped, tag = 'output window, operand 0, single buffered']
    %6 = vsyncpa [#allocation3], 0
    %7 = vsyncpa [#allocation4], 0
    // Predicated region
    $region2: #{tpu_custom_call.1} parent=1 // pred_check
      _
    $region3: #{tpu_custom_call.1} parent=1 // pred_check_branch
      %9 = sbr.rel (0) target = $region5
    $region4: #{tpu_custom_call.1} parent=1 // pred_region
      %s11 = ssub.s32 128, 32
      %12 = vsyncadd [#allocation3], %s11
      %s13 = sshll.u32 [#allocation2], 4
      %s14 = int_to_ptr.vmem [resolvable:$true] %s13
      %19 = dma.hbm_to_vmem [thread:$0]  %s0, 32, %s14, [#allocation3], 32, 32, 2
    $region5: #{tpu_custom_call.1} parent=1 // pred_fallthru
      _
    // Predicated region
    $region6: #{tpu_custom_call.1} parent=1 // pred_check
      _
    $region7: #{tpu_custom_call.1} parent=1 // pred_check_branch
      %21 = sbr.rel (0) target = $region9
    $region8: #{tpu_custom_call.1} parent=1 // pred_region
      %22 = dma.done [#allocation3], 128
    $region9: #{tpu_custom_call.1} parent=1 // pred_fallthru
      _
    %v23 = vld [vmem:[#allocation2] sm:$0xff]
    %vm24 = vcmp.eq.s32.totalorder %v23, 0
    %v25 = vsel %vm24, 1, 0
    %v26 = vcvt.s32.f32 %v25
    %27 = vst [vmem:[#allocation5] sm:$0xff] %v26
    // Predicated region
    $region10: #{tpu_custom_call.1} parent=1 // pred_check
      _
    $region11: #{tpu_custom_call.1} parent=1 // pred_check_branch
      %29 = sbr.rel (0) target = $region13
    $region12: #{tpu_custom_call.1} parent=1 // pred_region
      %s31 = ssub.s32 128, 32
      %32 = vsyncadd [#allocation4], %s31
      %s33 = sshll.u32 [#allocation5], 4
      %s34 = int_to_ptr.vmem [resolvable:$true] %s33
      %39 = dma.vmem_to_hbm [thread:$0]  %s34, 32, %s1, [#allocation4], 32, 32, 2
    $region13: #{tpu_custom_call.1} parent=1 // pred_fallthru
      _
    // Predicated region
    $region14: #{tpu_custom_call.1} parent=1 // pred_check
      _
    $region15: #{tpu_custom_call.1} parent=1 // pred_check_branch
      %41 = sbr.rel (0) target = $region17
    $region16: #{tpu_custom_call.1} parent=1 // pred_region
      %42 = dma.done [#allocation4], 128
    $region17: #{tpu_custom_call.1} parent=1 // pred_fallthru
      _
    %43 = vsyncpa [#allocation3], 1
    %44 = vsyncpa [#allocation4], 1

</llo_original>
